<compile_context>
chip_gen: v5e
topology: v5e:2x2
jax: 0.10.0
libtpu: 0.0.40
codegen_flags: <defaults>
</compile_context>

<pallas_src>
import numpy as np
import jax
import jax.numpy as jnp
from jax.experimental import pallas as pl
from jax.experimental.pallas import tpu as pltpu


def build_grid(resolution):
    """Same semantics as the PyTorch build_grid: (1, H, W, 4) float32."""
    ranges = [np.linspace(0.0, 1.0, num=res) for res in resolution]
    grid = np.meshgrid(*ranges, sparse=False, indexing='ij')
    grid = np.stack(grid, axis=-1)
    grid = np.reshape(grid, [resolution[0], resolution[1], -1])
    grid = np.expand_dims(grid, axis=0)
    grid = grid.astype(np.float32)
    return np.concatenate([grid, 1.0 - grid], axis=-1)          # (1, H, W, 4)


# --------------------------------------------------------------------------
# Kernel
# --------------------------------------------------------------------------
def _soft_pos_embed_kernel(g_ref, w_ref, x_ref, o_ref):
    # g_ref: (5, t_hw)     f32 — rows 0..3 = grid channels, row 4 = ones (bias)
    # w_ref: (C, 5)        f32 — cols 0..3 = dense weight, col 4 = bias
    # x_ref: (tb, C, t_hw) input tile
    # o_ref: (tb, C, t_hw)
    g = g_ref[...]                                               # (5, t_hw)
    w = w_ref[...]                                               # (C, 5)

    # pos[c, hw] = sum_k w[c, k] * g[k, hw] — K=5 contraction as unrolled
    # VPU broadcast FMAs (a handful of VALU bundles, hidden under the x DMA).
    pos = w[:, 0:1] * g[0:1, :]                                  # (C, t_hw) f32
    for k in range(1, 5):
        pos = pos + w[:, k:k + 1] * g[k:k + 1, :]

    # Add in f32, single cast at the store (bf16-safe, matches f32 reference).
    x = x_ref[...].astype(jnp.float32)
    o_ref[...] = (x + pos[None]).astype(o_ref.dtype)


# --------------------------------------------------------------------------
# Chip-aware tiling policy
# --------------------------------------------------------------------------
def _round_up(x, m):
    return ((x + m - 1) // m) * m


def _tpu_policy():
    """Returns (tensorcores_per_chip, physical_vmem_bytes) with safe fallbacks."""
    cores, vmem = 1, 128 * 1024 * 1024
    try:
        info = pltpu.get_tpu_info()
        v = getattr(info, "vmem_capacity_bytes", None)
        if isinstance(v, int) and v > 0:
            vmem = v
        for attr in ("num_cores", "num_tensorcores", "tensorcores_per_chip",
                     "core_count"):
            c = getattr(info, attr, None)
            if isinstance(c, int) and c > 0:
                cores = c
                break
    except Exception:
        pass
    if cores == 1:
        try:
            kind = jax.devices()[0].device_kind.lower()
            if "v7" in kind:                       # v7x: 2 TCs, 64 MiB VMEM/TC
                cores = 2
                vmem = min(vmem, 64 * 1024 * 1024)
        except Exception:
            pass
    return cores, vmem


def _pick_tiles(B, C, HW_pad, itemsize, cores, vmem_bytes):
    """Pick (tb, t_hw).  Blocks sit in the 1-8 MiB streaming sweet spot while
    4x double-buffering stays inside the chip's VMEM budget."""
    cap = int(min(8 << 20, max(1 << 20, vmem_bytes // 16)))

    # HW tile: multiple of 128 lanes that divides HW_pad.
    bytes_per_128 = max(1, C * 128 * itemsize)
    t_hw = min(HW_pad, max(1, cap // bytes_per_128) * 128)
    k = max(1, t_hw // 128)
    n128 = HW_pad // 128
    while n128 % k:
        k -= 1
    t_hw = k * 128

    # Batch tile: as many elements as fit under the cap.
    per_batch = C * t_hw * itemsize
    tb = max(1, min(B, cap // max(1, per_batch)))

    # v7x only: halve tb so both TensorCores get work, but never drop a block
    # below ~1 MiB (step overhead would beat the parallelism gain).
    n_hw = HW_pad // t_hw
    while (cores > 1 and tb > 1 and pl.cdiv(B, tb) * n_hw < cores
           and (tb // 2) * per_batch >= (1 << 20)):
        tb //= 2

    # Prefer a divisor of B (no batch padding) when it keeps blocks chunky.
    tb_div = tb
    while B % tb_div:
        tb_div -= 1
    if tb_div == tb or tb_div * per_batch >= (tb * per_batch) // 2:
        tb = tb_div
    return tb, t_hw


# --------------------------------------------------------------------------
# Wrapper
# --------------------------------------------------------------------------
def soft_position_embed(inputs, weight, bias, grid_nhwc, *, alias_input=False):
    """inputs: (B, C, H, W) NCHW; weight: (C, 4); bias: (C,); grid_nhwc: (1, H, W, 4).

    alias_input=True reuses the input HBM buffer for the output (only a win if
    the caller donates `inputs`; otherwise XLA inserts a copy)."""
    B, C, H, W = inputs.shape
    HW = H * W
    itemsize = inputs.dtype.itemsize

    cores, vmem_bytes = _tpu_policy()

    # Lane-dense layout: pad flattened spatial dim to a multiple of 128 so
    # every output row is an unmasked full-lane vst.
    HW_pad = _round_up(HW, 128)
    x_flat = inputs.reshape(B, C, HW)                            # free reshape
    if HW_pad != HW:
        x_flat = jnp.pad(x_flat, ((0, 0), (0, 0), (0, HW_pad - HW)))

    # Augment: fold bias into the projection.  pos = W_aug @ G_aug.
    grid_t = grid_nhwc.reshape(HW, 4).T.astype(jnp.float32)      # (4, HW)
    g_aug = jnp.concatenate([grid_t, jnp.ones((1, HW), jnp.float32)], axis=0)
    if HW_pad != HW:
        g_aug = jnp.pad(g_aug, ((0, 0), (0, HW_pad - HW)))       # (5, HW_pad)
    w_aug = jnp.concatenate(
        [weight.astype(jnp.float32), bias.astype(jnp.float32).reshape(C, 1)],
        axis=1)                                                  # (C, 5)

    tb, t_hw = _pick_tiles(B, C, HW_pad, itemsize, cores, vmem_bytes)
    B_pad = _round_up(B, tb)
    if B_pad != B:
        x_flat = jnp.pad(x_flat, ((0, B_pad - B), (0, 0), (0, 0)))
    n_b = B_pad // tb
    n_hw = HW_pad // t_hw

    block_bytes = tb * C * t_hw * itemsize
    vmem_limit = int(min(max(32 << 20, 6 * block_bytes + (2 << 20)),
                         max(vmem_bytes // 2, 16 << 20)))

    # Only v7x actually shards a grid axis across TensorCores (CORE_PARALLEL);
    # plain "parallel" elsewhere (measured near-identical to "arbitrary").
    if cores > 1 and hasattr(pltpu, "CORE_PARALLEL") and hasattr(pltpu, "ARBITRARY"):
        dim_sem = (pltpu.CORE_PARALLEL, pltpu.ARBITRARY)
    else:
        dim_sem = ("parallel", "arbitrary")

    cost = pl.CostEstimate(
        flops=B_pad * C * HW_pad + 10 * C * HW_pad * n_b * n_hw,
        bytes_accessed=2 * B_pad * C * HW_pad * itemsize + (5 * HW_pad + 5 * C) * 4,
        transcendentals=0)

    out_flat = pl.pallas_call(
        _soft_pos_embed_kernel,
        out_shape=jax.ShapeDtypeStruct((B_pad, C, HW_pad), inputs.dtype),
        grid_spec=pltpu.PrefetchScalarGridSpec(
            num_scalar_prefetch=0,
            grid=(n_b, n_hw),
            in_specs=[
                pl.BlockSpec((5, t_hw), lambda i, j: (0, j)),        # grid slice
                pl.BlockSpec((C, 5), lambda i, j: (0, 0)),           # weight+bias
                pl.BlockSpec((tb, C, t_hw), lambda i, j: (i, 0, j)),  # x tile
            ],
            out_specs=pl.BlockSpec((tb, C, t_hw), lambda i, j: (i, 0, j)),
        ),
        compiler_params=pltpu.CompilerParams(
            dimension_semantics=dim_sem,
            vmem_limit_bytes=vmem_limit,
        ),
        cost_estimate=cost,
        input_output_aliases=({2: 0} if alias_input else {}),
    )(g_aug, w_aug, x_flat)

    out = out_flat
    if B_pad != B:
        out = out[:B]
    if HW_pad != HW:
        out = out[..., :HW]
    return out.reshape(B, C, H, W)
    # TODO(synk): the true floor for this op is fusing the broadcast-add into
    # the producing conv / following projection; standalone it is HBM-roofline
    # bound (read x once, write out once).


if __name__ == "__main__":
    # Small shapes consistent with the module: batch=2, hidden=C=32, 16x16 grid.
    B, C, H, W = 2, 32, 16, 16
    resolution = (H, W)

    key = jax.random.PRNGKey(0)
    k_x, k_w, k_b = jax.random.split(key, 3)

    # Deterministic parameter init mimicking nn.Linear(4, hidden) uniform init.
    bound = 1.0 / np.sqrt(4.0)
    weight = jax.random.uniform(k_w, (C, 4), jnp.float32, -bound, bound)
    bias = jax.random.uniform(k_b, (C,), jnp.float32, -bound, bound)

    x = jax.random.normal(k_x, (B, C, H, W), jnp.float32)
    grid_nhwc = jnp.asarray(build_grid(resolution))              # (1, H, W, 4)

    out = soft_position_embed(x, weight, bias, grid_nhwc)
    out = jax.block_until_ready(out)

    # Pure-JAX reference (same math as the PyTorch forward).
    pos_ref = jnp.einsum('hwk,ck->chw', grid_nhwc[0], weight) + bias[:, None, None]
    ref = x + pos_ref[None]
    assert jnp.allclose(out, ref, atol=1e-5, rtol=1e-5)

    print("KERNEL_OK")
</pallas_src>

<mosaic_0001>
module attributes {stable_mosaic.version = 11 : i64} {
  func.func @_soft_pos_embed_kernel(%arg0: i32, %arg1: i32, %arg2: memref<5x256xf32, #tpu.memory_space<vmem>>, %arg3: memref<32x5xf32, #tpu.memory_space<vmem>>, %arg4: memref<2x32x256xf32, #tpu.memory_space<vmem>>, %arg5: memref<2x32x256xf32, #tpu.memory_space<vmem>>) attributes {dimension_semantics = [#tpu.dimension_semantics<parallel>, #tpu.dimension_semantics<arbitrary>], iteration_bounds = array<i64: 1, 1>, scalar_prefetch = 0 : i64, scratch_operands = 0 : i64, tpu.core_type = #tpu.core_type<tc>, window_params = [{transform_indices = @transform_0, window_bounds = array<i64: 5, 256>}, {pipeline_mode = #tpu.pipeline_mode<synchronous>, transform_indices = @transform_1, window_bounds = array<i64: 32, 5>}, {transform_indices = @transform_2, window_bounds = array<i64: 2, 32, 256>}, {transform_indices = @transform_3, window_bounds = array<i64: 2, 32, 256>}]} {
    %c0 = arith.constant 0 : index
    %c0_0 = arith.constant 0 : index
    %0 = vector.load %arg2[%c0, %c0_0] : memref<5x256xf32, #tpu.memory_space<vmem>>, vector<5x256xf32>
    %c0_1 = arith.constant 0 : index
    %c0_2 = arith.constant 0 : index
    %1 = vector.load %arg3[%c0_1, %c0_2] : memref<32x5xf32, #tpu.memory_space<vmem>>, vector<32x5xf32>
    %2 = vector.extract_strided_slice %1 {offsets = [0, 0], sizes = [32, 1], strides = [1, 1]} : vector<32x5xf32> to vector<32x1xf32>
    %3 = vector.extract_strided_slice %0 {offsets = [0, 0], sizes = [1, 256], strides = [1, 1]} : vector<5x256xf32> to vector<1x256xf32>
    %4 = vector.broadcast %2 : vector<32x1xf32> to vector<32x256xf32>
    %5 = vector.broadcast %3 : vector<1x256xf32> to vector<32x256xf32>
    %6 = arith.mulf %4, %5 : vector<32x256xf32>
    %7 = vector.extract_strided_slice %1 {offsets = [0, 1], sizes = [32, 1], strides = [1, 1]} : vector<32x5xf32> to vector<32x1xf32>
    %8 = vector.extract_strided_slice %0 {offsets = [1, 0], sizes = [1, 256], strides = [1, 1]} : vector<5x256xf32> to vector<1x256xf32>
    %9 = vector.broadcast %7 : vector<32x1xf32> to vector<32x256xf32>
    %10 = vector.broadcast %8 : vector<1x256xf32> to vector<32x256xf32>
    %11 = arith.mulf %9, %10 : vector<32x256xf32>
    %12 = arith.addf %6, %11 : vector<32x256xf32>
    %13 = vector.extract_strided_slice %1 {offsets = [0, 2], sizes = [32, 1], strides = [1, 1]} : vector<32x5xf32> to vector<32x1xf32>
    %14 = vector.extract_strided_slice %0 {offsets = [2, 0], sizes = [1, 256], strides = [1, 1]} : vector<5x256xf32> to vector<1x256xf32>
    %15 = vector.broadcast %13 : vector<32x1xf32> to vector<32x256xf32>
    %16 = vector.broadcast %14 : vector<1x256xf32> to vector<32x256xf32>
    %17 = arith.mulf %15, %16 : vector<32x256xf32>
    %18 = arith.addf %12, %17 : vector<32x256xf32>
    %19 = vector.extract_strided_slice %1 {offsets = [0, 3], sizes = [32, 1], strides = [1, 1]} : vector<32x5xf32> to vector<32x1xf32>
    %20 = vector.extract_strided_slice %0 {offsets = [3, 0], sizes = [1, 256], strides = [1, 1]} : vector<5x256xf32> to vector<1x256xf32>
    %21 = vector.broadcast %19 : vector<32x1xf32> to vector<32x256xf32>
    %22 = vector.broadcast %20 : vector<1x256xf32> to vector<32x256xf32>
    %23 = arith.mulf %21, %22 : vector<32x256xf32>
    %24 = arith.addf %18, %23 : vector<32x256xf32>
    %25 = vector.extract_strided_slice %1 {offsets = [0, 4], sizes = [32, 1], strides = [1, 1]} : vector<32x5xf32> to vector<32x1xf32>
    %26 = vector.extract_strided_slice %0 {offsets = [4, 0], sizes = [1, 256], strides = [1, 1]} : vector<5x256xf32> to vector<1x256xf32>
    %27 = vector.broadcast %25 : vector<32x1xf32> to vector<32x256xf32>
    %28 = vector.broadcast %26 : vector<1x256xf32> to vector<32x256xf32>
    %29 = arith.mulf %27, %28 : vector<32x256xf32>
    %30 = arith.addf %24, %29 : vector<32x256xf32>
    %c0_3 = arith.constant 0 : index
    %c0_4 = arith.constant 0 : index
    %c0_5 = arith.constant 0 : index
    %31 = vector.load %arg4[%c0_3, %c0_4, %c0_5] : memref<2x32x256xf32, #tpu.memory_space<vmem>>, vector<2x32x256xf32>
    %32 = vector.shape_cast %30 : vector<32x256xf32> to vector<1x32x256xf32>
    %33 = vector.broadcast %32 : vector<1x32x256xf32> to vector<2x32x256xf32>
    %34 = arith.addf %31, %33 : vector<2x32x256xf32>
    %c0_6 = arith.constant 0 : index
    %c0_7 = arith.constant 0 : index
    %c0_8 = arith.constant 0 : index
    %35 = vector.load %arg5[%c0_6, %c0_7, %c0_8] : memref<2x32x256xf32, #tpu.memory_space<vmem>>, vector<2x32x256xf32>
    tpu.vector_store %arg5[%c0_6, %c0_7, %c0_8], %34 {strides = array<i32>} : memref<2x32x256xf32, #tpu.memory_space<vmem>>, vector<2x32x256xf32>,
    return
  }
  func.func @transform_0(%arg0: i32, %arg1: i32) -> (i32, i32) {
    %c0_i32 = arith.constant 0 : i32
    %c0_i32_0 = arith.constant 0 : i32
    return %c0_i32, %arg1 : i32, i32
  }
  func.func @transform_1(%arg0: i32, %arg1: i32) -> (i32, i32) {
    %c0_i32 = arith.constant 0 : i32
    %c0_i32_0 = arith.constant 0 : i32
    %c0_i32_1 = arith.constant 0 : i32
    return %c0_i32, %c0_i32_0 : i32, i32
  }
  func.func @transform_2(%arg0: i32, %arg1: i32) -> (i32, i32, i32) {
    %c0_i32 = arith.constant 0 : i32
    %c0_i32_0 = arith.constant 0 : i32
    return %arg0, %c0_i32, %arg1 : i32, i32, i32
  }
  func.func @transform_3(%arg0: i32, %arg1: i32) -> (i32, i32, i32) {
    %c0_i32 = arith.constant 0 : i32
    %c0_i32_0 = arith.constant 0 : i32
    return %arg0, %c0_i32, %arg1 : i32, i32, i32
  }
}

</mosaic_0001>

<llo_original>
// kernel: tpu_custom_call.1
$region0: #{tpu_custom_call.1}
  #allocation0 [shape = 'u32[]', space=smem, size = 0x4, offset = 0x4, fixed_abs, tag = 'smem constant byte address 0x4 - core index']
  #allocation1 [shape = 'u32[72,128]{1,0:T(1,128)}', space=vmem, size = 0x9000, scoped, tag = 'internal scratch']
  %s0 = inlined_call_operand.vmem [shape: f32[5,256], index: 0, kind: input, shape index: {}]
  %s1 = inlined_call_operand.vmem [shape: f32[32,5], index: 1, kind: input, shape index: {}]
  %s2 = inlined_call_operand.hbm [shape: f32[2,32,256], index: 2, kind: input, shape index: {}]
  %s3 = inlined_call_operand.hbm [shape: f32[2,32,256], index: 3, kind: output, shape index: {}]
  %s4 = sld [smem:[#allocation0]]
  $region26: #{tpu_custom_call.1} parent=0
    _
  %s6 = ssub.s32 1, %s4
  %s7 = scalar_select 0, %s6, %s4
  $region1: #{tpu_custom_call.1} parent=0
    #allocation2 [shape = 'u8[65536]{0}', space=vmem, size = 0x10000, scoped, tag = 'input window, operand 2, single buffered']
    #allocation3 [shape = 's32[1]{0}', space=sflag, size = 0x4, scoped, tag = 'scoped memory for tpu_custom_call.1']
    #allocation4 [shape = 's32[1]{0}', space=sflag, size = 0x4, scoped, tag = 'scoped memory for tpu_custom_call.1']
    #allocation5 [shape = 'u8[65536]{0}', space=vmem, size = 0x10000, scoped, tag = 'output window, operand 0, single buffered']
    %8 = vsyncpa [#allocation3], 0
    %9 = vsyncpa [#allocation4], 0
    // Predicated region
    $region2: #{tpu_custom_call.1} parent=1 // pred_check
      _
    $region3: #{tpu_custom_call.1} parent=1 // pred_check_branch
      %11 = sbr.rel (0) target = $region5
    $region4: #{tpu_custom_call.1} parent=1 // pred_region
      _
    $region5: #{tpu_custom_call.1} parent=1 // pred_fallthru
      _
    // Predicated region
    $region6: #{tpu_custom_call.1} parent=1 // pred_check
      _
    $region7: #{tpu_custom_call.1} parent=1 // pred_check_branch
      %13 = sbr.rel (0) target = $region9
    $region8: #{tpu_custom_call.1} parent=1 // pred_region
      _
    $region9: #{tpu_custom_call.1} parent=1 // pred_fallthru
      _
    // Predicated region
    $region10: #{tpu_custom_call.1} parent=1 // pred_check
      _
    $region11: #{tpu_custom_call.1} parent=1 // pred_check_branch
      %15 = sbr.rel (0) target = $region13
    $region12: #{tpu_custom_call.1} parent=1 // pred_region
      %17 = vsyncadd [#allocation3], 0
      %s18 = sshll.u32 %s2, 4
      %s19 = int_to_ptr.hbm [resolvable:$true] %s18
      %s20 = sshll.u32 [#allocation2], 4
      %s21 = int_to_ptr.vmem [resolvable:$true] %s20
      %26 = dma.hbm_to_vmem [thread:$0]  %s19, 2048, %s21, [#allocation3], 256, 256, 16
    $region13: #{tpu_custom_call.1} parent=1 // pred_fallthru
      _
    // Predicated region
    $region14: #{tpu_custom_call.1} parent=1 // pred_check
      _
    $region15: #{tpu_custom_call.1} parent=1 // pred_check_branch
      %28 = sbr.rel (0) target = $region17
    $region16: #{tpu_custom_call.1} parent=1 // pred_region
      %30 = dma.done [#allocation3], 2048
    $region17: #{tpu_custom_call.1} parent=1 // pred_fallthru
      _
    %v31 = vld [vmem:[%s0] sm:$0x1f]
    %v32 = vld [vmem:[%s0 + $0x8] sm:$0x1f]
    %v33 = vld [vmem:[%s1] sm:$0xff]
    %v34 = vld [vmem:[%s1 + $0x8] sm:$0xff]
    %v35 = vld [vmem:[%s1 + $0x10] sm:$0xff]
    %v36 = vld [vmem:[%s1 + $0x18] sm:$0xff]
    %38 = vset.pattern.permute.xlu0 0
    %39 = vperm.xlu0 %38, %v33
    %v40 = vpop.permute.xlu0 %39
    %43 = vset.pattern.permute.xlu0 0
    %44 = vperm.xlu0 %43, %v34
    %v45 = vpop.permute.xlu0 %44
    %48 = vset.pattern.permute.xlu0 0
    %49 = vperm.xlu0 %48, %v35
    %v50 = vpop.permute.xlu0 %49
    %53 = vset.pattern.permute.xlu0 0
    %54 = vperm.xlu0 %53, %v36
    %v55 = vpop.permute.xlu0 %54
    %v57 = vperm.slane %v31, 0
    %v58 = vperm.slane %v32, 0
    %v59 = vmul.f32 %v40, %v57
    %v60 = vmul.f32 %v40, %v58
    %v61 = vmul.f32 %v45, %v57
    %v62 = vmul.f32 %v45, %v58
    %v63 = vmul.f32 %v50, %v57
    %v64 = vmul.f32 %v50, %v58
    %v65 = vmul.f32 %v55, %v57
    %v66 = vmul.f32 %v55, %v58
    %67 = vset.pattern.permute.xlu0 1
    %68 = vperm.xlu0 %67, %v33
    %v69 = vpop.permute.xlu0 %68
    %71 = vset.pattern.permute.xlu0 1
    %72 = vperm.xlu0 %71, %v34
    %v73 = vpop.permute.xlu0 %72
    %75 = vset.pattern.permute.xlu0 1
    %76 = vperm.xlu0 %75, %v35
    %v77 = vpop.permute.xlu0 %76
    %79 = vset.pattern.permute.xlu0 1
    %80 = vperm.xlu0 %79, %v36
    %v81 = vpop.permute.xlu0 %80
    %v83 = vperm.slane %v31, 1
    %v84 = vperm.slane %v32, 1
    %v85 = vmul.f32 %v69, %v83
    %v86 = vmul.f32 %v69, %v84
    %v87 = vmul.f32 %v73, %v83
    %v88 = vmul.f32 %v73, %v84
    %v89 = vmul.f32 %v77, %v83
    %v90 = vmul.f32 %v77, %v84
    %v91 = vmul.f32 %v81, %v83
    %v92 = vmul.f32 %v81, %v84
    %v93 = vadd.f32 %v59, %v85
    %v94 = vadd.f32 %v60, %v86
    %v95 = vadd.f32 %v61, %v87
    %v96 = vadd.f32 %v62, %v88
    %v97 = vadd.f32 %v63, %v89
    %v98 = vadd.f32 %v64, %v90
    %v99 = vadd.f32 %v65, %v91
    %v100 = vadd.f32 %v66, %v92
    %101 = vset.pattern.permute.xlu0 2
    %102 = vperm.xlu0 %101, %v33
    %v103 = vpop.permute.xlu0 %102
    %105 = vset.pattern.permute.xlu0 2
    %106 = vperm.xlu0 %105, %v34
    %v107 = vpop.permute.xlu0 %106
    %109 = vset.pattern.permute.xlu0 2
    %110 = vperm.xlu0 %109, %v35
    %v111 = vpop.permute.xlu0 %110
    %113 = vset.pattern.permute.xlu0 2
    %114 = vperm.xlu0 %113, %v36
    %v115 = vpop.permute.xlu0 %114
    %v117 = vperm.slane %v31, 2
    %v118 = vperm.slane %v32, 2
    %v119 = vmul.f32 %v103, %v117
    %v120 = vmul.f32 %v103, %v118
    %v121 = vmul.f32 %v107, %v117
    %v122 = vmul.f32 %v107, %v118
    %v123 = vmul.f32 %v111, %v117
    %v124 = vmul.f32 %v111, %v118
    %v125 = vmul.f32 %v115, %v117
    %v126 = vmul.f32 %v115, %v118
    %v127 = vadd.f32 %v93, %v119
    %v128 = vadd.f32 %v94, %v120
    %v129 = vadd.f32 %v95, %v121
    %v130 = vadd.f32 %v96, %v122
    %v131 = vadd.f32 %v97, %v123
    %v132 = vadd.f32 %v98, %v124
    %v133 = vadd.f32 %v99, %v125
    %v134 = vadd.f32 %v100, %v126
    %135 = vset.pattern.permute.xlu0 3
    %136 = vperm.xlu0 %135, %v33
    %v137 = vpop.permute.xlu0 %136
    %139 = vset.pattern.permute.xlu0 3
    %140 = vperm.xlu0 %139, %v34
    %v141 = vpop.permute.xlu0 %140
    %143 = vset.pattern.permute.xlu0 3
    %144 = vperm.xlu0 %143, %v35
    %v145 = vpop.permute.xlu0 %144
    %147 = vset.pattern.permute.xlu0 3
    %148 = vperm.xlu0 %147, %v36
    %v149 = vpop.permute.xlu0 %148
    %v151 = vperm.slane %v31, 3
    %v152 = vperm.slane %v32, 3
    %v153 = vmul.f32 %v137, %v151
    %v154 = vmul.f32 %v137, %v152
    %v155 = vmul.f32 %v141, %v151
    %v156 = vmul.f32 %v141, %v152
    %v157 = vmul.f32 %v145, %v151
    %v158 = vmul.f32 %v145, %v152
    %v159 = vmul.f32 %v149, %v151
    %v160 = vmul.f32 %v149, %v152
    %v161 = vadd.f32 %v127, %v153
    %v162 = vadd.f32 %v128, %v154
    %v163 = vadd.f32 %v129, %v155
    %v164 = vadd.f32 %v130, %v156
    %v165 = vadd.f32 %v131, %v157
    %v166 = vadd.f32 %v132, %v158
    %v167 = vadd.f32 %v133, %v159
    %v168 = vadd.f32 %v134, %v160
    %169 = vset.pattern.permute.xlu0 4
    %170 = vperm.xlu0 %169, %v33
    %v171 = vpop.permute.xlu0 %170
    %173 = vset.pattern.permute.xlu0 4
    %174 = vperm.xlu0 %173, %v34
    %v175 = vpop.permute.xlu0 %174
    %177 = vset.pattern.permute.xlu0 4
    %178 = vperm.xlu0 %177, %v35
    %v179 = vpop.permute.xlu0 %178
    %181 = vset.pattern.permute.xlu0 4
    %182 = vperm.xlu0 %181, %v36
    %v183 = vpop.permute.xlu0 %182
    %v185 = vperm.slane %v31, 4
    %v186 = vperm.slane %v32, 4
    %v187 = vmul.f32 %v171, %v185
    %v188 = vmul.f32 %v171, %v186
    %v189 = vmul.f32 %v175, %v185
    %v190 = vmul.f32 %v175, %v186
    %v191 = vmul.f32 %v179, %v185
    %v192 = vmul.f32 %v179, %v186
    %v193 = vmul.f32 %v183, %v185
    %v194 = vmul.f32 %v183, %v186
    %v195 = vadd.f32 %v161, %v187
    %v196 = vadd.f32 %v162, %v188
    %v197 = vadd.f32 %v163, %v189
    %v198 = vadd.f32 %v164, %v190
    %v199 = vadd.f32 %v165, %v191
    %v200 = vadd.f32 %v166, %v192
    %v201 = vadd.f32 %v167, %v193
    %v202 = vadd.f32 %v168, %v194
    %v203 = vld [vmem:[#allocation2] sm:$0xff]
    %v204 = vld [vmem:[#allocation2 + $0x8] sm:$0xff]
    %v205 = vld [vmem:[#allocation2 + $0x10] sm:$0xff]
    %v206 = vld [vmem:[#allocation2 + $0x18] sm:$0xff]
    %v207 = vld [vmem:[#allocation2 + $0x20] sm:$0xff]
    %v208 = vld [vmem:[#allocation2 + $0x28] sm:$0xff]
    %v209 = vld [vmem:[#allocation2 + $0x30] sm:$0xff]
    %v210 = vld [vmem:[#allocation2 + $0x38] sm:$0xff]
    %v211 = vld [vmem:[#allocation2 + $0x40] sm:$0xff]
    %v212 = vld [vmem:[#allocation2 + $0x48] sm:$0xff]
    %v213 = vld [vmem:[#allocation2 + $0x50] sm:$0xff]
    %v214 = vld [vmem:[#allocation2 + $0x58] sm:$0xff]
    %v215 = vld [vmem:[#allocation2 + $0x60] sm:$0xff]
    %v216 = vld [vmem:[#allocation2 + $0x68] sm:$0xff]
    %v217 = vld [vmem:[#allocation2 + $0x70] sm:$0xff]
    %v218 = vld [vmem:[#allocation2 + $0x78] sm:$0xff]
    %v219 = vadd.f32 %v203, %v195
    %v220 = vadd.f32 %v204, %v196
    %v221 = vadd.f32 %v205, %v197
    %v222 = vadd.f32 %v206, %v198
    %v223 = vadd.f32 %v207, %v199
    %v224 = vadd.f32 %v208, %v200
    %v225 = vadd.f32 %v209, %v201
    %v226 = vadd.f32 %v210, %v202
    %v227 = vadd.f32 %v211, %v195
    %v228 = vadd.f32 %v212, %v196
    %v229 = vadd.f32 %v213, %v197
    %v230 = vadd.f32 %v214, %v198
    %v231 = vadd.f32 %v215, %v199
    %v232 = vadd.f32 %v216, %v200
    %v233 = vadd.f32 %v217, %v201
    %v234 = vadd.f32 %v218, %v202
    %235 = vst [vmem:[#allocation5] sm:$0xff] %v219
    %236 = vst [vmem:[#allocation5 + $0x8] sm:$0xff] %v220
    %237 = vst [vmem:[#allocation5 + $0x10] sm:$0xff] %v221
    %238 = vst [vmem:[#allocation5 + $0x18] sm:$0xff] %v222
    %239 = vst [vmem:[#allocation5 + $0x20] sm:$0xff] %v223
    %240 = vst [vmem:[#allocation5 + $0x28] sm:$0xff] %v224
    %241 = vst [vmem:[#allocation5 + $0x30] sm:$0xff] %v225
    %242 = vst [vmem:[#allocation5 + $0x38] sm:$0xff] %v226
    %243 = vst [vmem:[#allocation5 + $0x40] sm:$0xff] %v227
    %244 = vst [vmem:[#allocation5 + $0x48] sm:$0xff] %v228
    %245 = vst [vmem:[#allocation5 + $0x50] sm:$0xff] %v229
    %246 = vst [vmem:[#allocation5 + $0x58] sm:$0xff] %v230
    %247 = vst [vmem:[#allocation5 + $0x60] sm:$0xff] %v231
    %248 = vst [vmem:[#allocation5 + $0x68] sm:$0xff] %v232
    %249 = vst [vmem:[#allocation5 + $0x70] sm:$0xff] %v233
    %250 = vst [vmem:[#allocation5 + $0x78] sm:$0xff] %v234
    // Predicated region
    $region18: #{tpu_custom_call.1} parent=1 // pred_check
      _
    $region19: #{tpu_custom_call.1} parent=1 // pred_check_branch
      %252 = sbr.rel (0) target = $region21
    $region20: #{tpu_custom_call.1} parent=1 // pred_region
      %254 = vsyncadd [#allocation4], 0
      %s255 = sshll.u32 [#allocation5], 4
      %s256 = int_to_ptr.vmem [resolvable:$true] %s255
      %s257 = sshll.u32 %s3, 4
      %s258 = int_to_ptr.hbm [resolvable:$true] %s257
      %263 = dma.vmem_to_hbm [thread:$0]  %s256, 2048, %s258, [#allocation4], 256, 256, 16
    $region21: #{tpu_custom_call.1} parent=1 // pred_fallthru
      _
    // Predicated region
    $region22: #{tpu_custom_call.1} parent=1 // pred_check
      _
    $region23: #{tpu_custom_call.1} parent=1 // pred_check_branch
      %265 = sbr.rel (0) target = $region25
    $region24: #{tpu_custom_call.1} parent=1 // pred_region
      %267 = dma.done [#allocation4], 2048
    $region25: #{tpu_custom_call.1} parent=1 // pred_fallthru
      _
    %268 = vsyncpa [#allocation3], 1
    %269 = vsyncpa [#allocation4], 1

</llo_original>
